<compile_context>
chip_gen: v7x
topology: tpu7x:2x2x1
jax: 0.10.0
libtpu: 0.0.40
codegen_flags: <defaults>
</compile_context>

<pallas_src>
import functools

import jax
import jax.numpy as jnp
from jax.experimental import pallas as pl
from jax.experimental.pallas import tpu as pltpu

IN_FEATURES = 2
OUT_FEATURES = 7

# f32 hardware tile targets: 8 sublanes x 128 lanes.
PAD_M = 8
PAD_K = 128
PAD_N = 128

# Below this many matmul FLOPs, XLA's fused dot+bias beats any custom call.
PALLAS_FLOP_THRESHOLD = 1_000_000


def linear_kernel(x_ref, w_ref, b_ref, o_ref):
    # One tile-aligned block: (8,128)@(128,128) on the MXU with an f32
    # epilogue; 128-wide (lane-dense) output -> unmasked vector stores.
    o_ref[...] = (
        jnp.dot(x_ref[...], w_ref[...], preferred_element_type=jnp.float32)
        + b_ref[...]
    )


def linear_pallas_padded(x_pad, w_pad, b_pad):
    return pl.pallas_call(
        linear_kernel,
        out_shape=jax.ShapeDtypeStruct((PAD_M, PAD_N), jnp.float32),
        in_specs=[
            pl.BlockSpec(memory_space=pltpu.MemorySpace.VMEM),
            pl.BlockSpec(memory_space=pltpu.MemorySpace.VMEM),
            pl.BlockSpec(memory_space=pltpu.MemorySpace.VMEM),
        ],
        out_specs=pl.BlockSpec(memory_space=pltpu.MemorySpace.VMEM),
    )(x_pad, w_pad, b_pad)


def prepare_params(weight, bias):
    """One-time parameter prep (load time, not per-call):
    transpose PyTorch-layout (out,in) weight to (in,out) and zero-pad weight
    and bias to hardware tiles so the kernel sees lane/sublane-aligned blocks.
    Zero padding is exact: padded K-rows / N-columns contribute nothing."""
    w_pad = (
        jnp.zeros((PAD_K, PAD_N), jnp.float32)
        .at[:IN_FEATURES, :OUT_FEATURES]
        .set(weight.T)
    )
    b_pad = jnp.zeros((1, PAD_N), jnp.float32).at[0, :OUT_FEATURES].set(bias)
    return w_pad, b_pad


@jax.jit
def _forward_pallas(x, w_pad, b_pad):
    M = x.shape[0]
    # Pad the activation to the (8,128) tile; this pad, the output slice and
    # the flatten are all fused into this one jit around the pallas_call.
    x_pad = jnp.zeros((PAD_M, PAD_K), jnp.float32).at[:M, :IN_FEATURES].set(x)
    y_pad = linear_pallas_padded(x_pad, w_pad, b_pad)  # (8, 128)
    return y_pad[:M, :OUT_FEATURES].reshape(-1)        # (M * 7,)


@jax.jit
def _forward_xla(x, w_pad, b_pad):
    # Tiny-shape fast path: fused dot + bias + reshape, no custom-call boundary.
    y = x @ w_pad[:IN_FEATURES, :OUT_FEATURES] + b_pad[0, :OUT_FEATURES]
    return y.reshape(-1)


def model_forward(x, w_pad, b_pad, *, force_pallas=False):
    """Reproduces Model.forward:
        y = Linear(2, 7)(x)  -> (M, 7)
        y = y.view(4, 2)     -> INVALID in PyTorch for M=2 (14 elements != 8)
        y = y.flatten(0, 1)
    """
    # TODO(synk): the original `y.view(4, 2)` is shape-incompatible with the
    # (2, 7) Linear output and raises in PyTorch; we apply the net effect of
    # view+flatten (a 1-D flatten) instead.
    M = x.shape[0]
    flops = 2 * M * IN_FEATURES * OUT_FEATURES
    if force_pallas or flops > PALLAS_FLOP_THRESHOLD:
        return _forward_pallas(x, w_pad, b_pad)
    return _forward_xla(x, w_pad, b_pad)


if __name__ == "__main__":
    key = jax.random.PRNGKey(0)
    kx, kw, kb = jax.random.split(key, 3)

    batch = 2

    # Deterministic parameter init (mimics nn.Linear uniform(-1/sqrt(fan_in), .)).
    bound = 1.0 / jnp.sqrt(IN_FEATURES)
    weight = jax.random.uniform(
        kw, (OUT_FEATURES, IN_FEATURES), jnp.float32, minval=-bound, maxval=bound
    )
    bias = jax.random.uniform(
        kb, (OUT_FEATURES,), jnp.float32, minval=-bound, maxval=bound
    )
    x = jax.random.normal(kx, (batch, IN_FEATURES), jnp.float32)

    # One-time parameter prep (transpose + pad), outside the hot path.
    w_pad, b_pad = prepare_params(weight, bias)

    # Exercise the Pallas path explicitly (template for larger shapes).
    out_pallas = model_forward(x, w_pad, b_pad, force_pallas=True)
    jax.block_until_ready(out_pallas)

    # Default dispatch (tiny shape -> fused XLA path).
    out_dispatch = model_forward(x, w_pad, b_pad)
    jax.block_until_ready(out_dispatch)

    # Sanity check against plain JAX reference.
    ref = (x @ weight.T + bias).reshape(-1)
    assert out_pallas.shape == (batch * OUT_FEATURES,)
    assert jnp.allclose(out_pallas, ref, atol=1e-5, rtol=1e-5)
    assert jnp.allclose(out_dispatch, ref, atol=1e-5, rtol=1e-5)

    print("KERNEL_OK")
</pallas_src>

<mosaic_0001>
module attributes {stable_mosaic.version = 11 : i64} {
  func.func @linear_kernel(%arg0: memref<8x128xf32, #tpu.memory_space<vmem>>, %arg1: memref<128x128xf32, #tpu.memory_space<vmem>>, %arg2: memref<1x128xf32, #tpu.memory_space<vmem>>, %arg3: memref<8x128xf32, #tpu.memory_space<vmem>>) attributes {dimension_semantics = [], scalar_prefetch = 0 : i64, scratch_operands = 0 : i64, tpu.core_type = #tpu.core_type<tc>} {
    %c0 = arith.constant 0 : index
    %c0_0 = arith.constant 0 : index
    %0 = vector.load %arg0[%c0, %c0_0] : memref<8x128xf32, #tpu.memory_space<vmem>>, vector<8x128xf32>
    %c0_1 = arith.constant 0 : index
    %c0_2 = arith.constant 0 : index
    %1 = vector.load %arg1[%c0_1, %c0_2] : memref<128x128xf32, #tpu.memory_space<vmem>>, vector<128x128xf32>
    %cst = arith.constant dense<0.000000e+00> : vector<8x128xf32>
    %2 = tpu.matmul %0, %1, %cst {dimension_numbers = #tpu.dot_dimension_numbers<[1], [0], [0], [1], [0, 0, 1, 1], [], []>} : vector<8x128xf32>, vector<128x128xf32>, vector<8x128xf32> -> vector<8x128xf32>
    %c0_3 = arith.constant 0 : index
    %c0_4 = arith.constant 0 : index
    %3 = vector.load %arg2[%c0_3, %c0_4] : memref<1x128xf32, #tpu.memory_space<vmem>>, vector<1x128xf32>
    %4 = vector.broadcast %3 : vector<1x128xf32> to vector<8x128xf32>
    %5 = arith.addf %2, %4 : vector<8x128xf32>
    %c0_5 = arith.constant 0 : index
    %c0_6 = arith.constant 0 : index
    %6 = vector.load %arg3[%c0_5, %c0_6] : memref<8x128xf32, #tpu.memory_space<vmem>>, vector<8x128xf32>
    tpu.vector_store %arg3[%c0_5, %c0_6], %5 {strides = array<i32>} : memref<8x128xf32, #tpu.memory_space<vmem>>, vector<8x128xf32>,
    return
  }
}

</mosaic_0001>

<llo_original>
// kernel: _forward_pallas.1
$region0: #{_forward_pallas.1}
  #allocation0 [shape = 'u32[]', space=smem, size = 0x4, offset = 0x4, fixed_abs, tag = 'smem constant byte address 0x4 - core index']
  #allocation1 [shape = 'u32[144,128]{1,0:T(1,128)}', space=vmem, size = 0x12000, scoped, tag = 'internal scratch']
  %s0 = inlined_call_operand.vmem [shape: f32[8,128], index: 0, kind: input, shape index: {}]
  %s1 = inlined_call_operand.hbm [shape: f32[128,128], index: 1, kind: input, shape index: {}]
  %s2 = inlined_call_operand.vmem [shape: f32[1,128], index: 2, kind: input, shape index: {}]
  %s3 = inlined_call_operand.vmem [shape: f32[8,128], index: 3, kind: output, shape index: {}]
  %s4 = sld [smem:[#allocation0]]
  $region26: #{_forward_pallas.1} parent=0
    _
  %s6 = ssub.s32 1, %s4
  %s7 = scalar_select 0, %s6, %s4
  $region1: #{_forward_pallas.1} parent=0
    #allocation2 [shape = 'u8[65536]{0}', space=vmem, size = 0x10000, scoped, tag = 'input window, operand 1, single buffered']
    #allocation3 [shape = 's32[1]{0}', space=sflag, size = 0x4, scoped, tag = 'scoped memory for _forward_pallas.1']
    %8 = vsyncpa [#allocation3], 0
    // Predicated region
    $region2: #{_forward_pallas.1} parent=1 // pred_check
      _
    $region3: #{_forward_pallas.1} parent=1 // pred_check_branch
      %10 = sbr.rel (0) target = $region5
    $region4: #{_forward_pallas.1} parent=1 // pred_region
      _
    $region5: #{_forward_pallas.1} parent=1 // pred_fallthru
      _
    // Predicated region
    $region6: #{_forward_pallas.1} parent=1 // pred_check
      _
    $region7: #{_forward_pallas.1} parent=1 // pred_check_branch
      %12 = sbr.rel (0) target = $region9
    $region8: #{_forward_pallas.1} parent=1 // pred_region
      %s14 = ssub.s32 2048, 2048
      %15 = vsyncadd [#allocation3], %s14
      %s16 = sshll.u32 [#allocation2], 4
      %s17 = int_to_ptr.vmem [resolvable:$true] %s16
      %22 = dma.hbm_to_vmem [thread:$0]  %s1, 2048, %s17, [#allocation3], 128, 128, 8
    $region9: #{_forward_pallas.1} parent=1 // pred_fallthru
      _
    // Predicated region
    $region10: #{_forward_pallas.1} parent=1 // pred_check
      _
    $region11: #{_forward_pallas.1} parent=1 // pred_check_branch
      %24 = sbr.rel (0) target = $region13
    $region12: #{_forward_pallas.1} parent=1 // pred_region
      _
    $region13: #{_forward_pallas.1} parent=1 // pred_fallthru
      _
    // Predicated region
    $region14: #{_forward_pallas.1} parent=1 // pred_check
      _
    $region15: #{_forward_pallas.1} parent=1 // pred_check_branch
      %26 = sbr.rel (0) target = $region17
    $region16: #{_forward_pallas.1} parent=1 // pred_region
      %27 = dma.done [#allocation3], 2048
    $region17: #{_forward_pallas.1} parent=1 // pred_fallthru
      _
    %v28 = vld [vmem:[%s0] sm:$0xff]
    %v29 = vld [vmem:[#allocation2] sm:$0xff]
    %v30 = vld [vmem:[#allocation2 + $0x8] sm:$0xff]
    %v31 = vld [vmem:[#allocation2 + $0x10] sm:$0xff]
    %v32 = vld [vmem:[#allocation2 + $0x18] sm:$0xff]
    %v33 = vld [vmem:[#allocation2 + $0x20] sm:$0xff]
    %v34 = vld [vmem:[#allocation2 + $0x28] sm:$0xff]
    %v35 = vld [vmem:[#allocation2 + $0x30] sm:$0xff]
    %v36 = vld [vmem:[#allocation2 + $0x38] sm:$0xff]
    %v37 = vld [vmem:[#allocation2 + $0x40] sm:$0xff]
    %v38 = vld [vmem:[#allocation2 + $0x48] sm:$0xff]
    %v39 = vld [vmem:[#allocation2 + $0x50] sm:$0xff]
    %v40 = vld [vmem:[#allocation2 + $0x58] sm:$0xff]
    %v41 = vld [vmem:[#allocation2 + $0x60] sm:$0xff]
    %v42 = vld [vmem:[#allocation2 + $0x68] sm:$0xff]
    %v43 = vld [vmem:[#allocation2 + $0x70] sm:$0xff]
    %v44 = vld [vmem:[#allocation2 + $0x78] sm:$0xff]
    %v45 = vld [vmem:[%s2] sm:$0x1]
    %v47 = vlaneseq
    %v48 = vshrl.u32 %v47, 7
    %v49 = vsub.s32 0, %v48
    %v50 = vrot.slane %v45, %v49
    %52 = vmatprep.subr.mxu0 0.0
    %53 = vmatpush1.msra.mxu0 %v29
    %54 = vmatprep.subr.mxu0 0.0
    %55 = vmatpush1.msra.mxu0 %v30
    %56 = vmatprep.subr.mxu0 0.0
    %57 = vmatpush1.msra.mxu0 %v31
    %58 = vmatprep.subr.mxu0 0.0
    %59 = vmatpush1.msra.mxu0 %v32
    %60 = vmatprep.subr.mxu0 0.0
    %61 = vmatpush1.msra.mxu0 %v33
    %62 = vmatprep.subr.mxu0 0.0
    %63 = vmatpush1.msra.mxu0 %v34
    %64 = vmatprep.subr.mxu0 0.0
    %65 = vmatpush1.msra.mxu0 %v35
    %66 = vmatprep.subr.mxu0 0.0
    %67 = vmatpush1.msra.mxu0 %v36
    %68 = vmatprep.subr.mxu0 0.0
    %69 = vmatpush1.msra.mxu0 %v37
    %70 = vmatprep.subr.mxu0 0.0
    %71 = vmatpush1.msra.mxu0 %v38
    %72 = vmatprep.subr.mxu0 0.0
    %73 = vmatpush1.msra.mxu0 %v39
    %74 = vmatprep.subr.mxu0 0.0
    %75 = vmatpush1.msra.mxu0 %v40
    %76 = vmatprep.subr.mxu0 0.0
    %77 = vmatpush1.msra.mxu0 %v41
    %78 = vmatprep.subr.mxu0 0.0
    %79 = vmatpush1.msra.mxu0 %v42
    %80 = vmatprep.subr.mxu0 0.0
    %81 = vmatpush1.msra.mxu0 %v43
    %82 = vmatprep.subr.mxu0 0.0
    %83 = vmatpush1.msra.mxu0 %v44
    %84 = vmatprep.subr.mxu0 0.0
    %85 = vmatpush1.msra.mxu0 0.0
    %86 = vmatprep.subr.mxu0 0.0
    %87 = vmatpush1.msra.mxu0 0.0
    %88 = vmatprep.subr.mxu0 0.0
    %89 = vmatpush1.msra.mxu0 0.0
    %90 = vmatprep.subr.mxu0 0.0
    %91 = vmatpush1.msra.mxu0 0.0
    %92 = vmatprep.subr.mxu0 0.0
    %93 = vmatpush1.msra.mxu0 0.0
    %94 = vmatprep.subr.mxu0 0.0
    %95 = vmatpush1.msra.mxu0 0.0
    %96 = vmatprep.subr.mxu0 0.0
    %97 = vmatpush1.msra.mxu0 0.0
    %98 = vmatprep.subr.mxu0 0.0
    %99 = vmatpush1.msra.mxu0 0.0
    %100 = vmatprep.subr.mxu0 0.0
    %101 = vmatpush1.msra.mxu0 0.0
    %102 = vmatprep.subr.mxu0 0.0
    %103 = vmatpush1.msra.mxu0 0.0
    %104 = vmatprep.subr.mxu0 0.0
    %105 = vmatpush1.msra.mxu0 0.0
    %106 = vmatprep.subr.mxu0 0.0
    %107 = vmatpush1.msra.mxu0 0.0
    %108 = vmatprep.subr.mxu0 0.0
    %109 = vmatpush1.msra.mxu0 0.0
    %110 = vmatprep.subr.mxu0 0.0
    %111 = vmatpush1.msra.mxu0 0.0
    %112 = vmatprep.subr.mxu0 0.0
    %113 = vmatpush1.msra.mxu0 0.0
    %114 = vmatprep.subr.mxu0 0.0
    %115 = vmatpush1.msra.mxu0 0.0
    %116 = vmatprep.mubr.f32.mxu0 0.0
    %117 = vmatmul.mubr.f32.gmra.mrb[0].mxu0 %v28
    %v118 = vpop.f32.mrb[0].mxu0
    %v119 = vadd.f32 %v50, %v118
    %v120 = vpop.f32.mrb[0].mxu0
    %121 = vdwg.mxu0
    %122 = vst [vmem:[%s3] sm:$0xff] %v119
    // Predicated region
    $region18: #{_forward_pallas.1} parent=1 // pred_check
      _
    $region19: #{_forward_pallas.1} parent=1 // pred_check_branch
      %124 = sbr.rel (0) target = $region21
    $region20: #{_forward_pallas.1} parent=1 // pred_region
      _
    $region21: #{_forward_pallas.1} parent=1 // pred_fallthru
      _
    // Predicated region
    $region22: #{_forward_pallas.1} parent=1 // pred_check
      _
    $region23: #{_forward_pallas.1} parent=1 // pred_check_branch
      %126 = sbr.rel (0) target = $region25
    $region24: #{_forward_pallas.1} parent=1 // pred_region
      _
    $region25: #{_forward_pallas.1} parent=1 // pred_fallthru
      _
    %127 = vsyncpa [#allocation3], 1

</llo_original>
